<compile_context>
chip_gen: v5e
topology: v5e:2x2
jax: 0.10.0
libtpu: 0.0.40
codegen_flags: <defaults>
</compile_context>

<pallas_src>
import functools
import math

import jax
import jax.numpy as jnp
from jax import lax
from jax.experimental import pallas as pl
from jax.experimental.pallas import tpu as pltpu


def _lora_kernel(x_ref, wd_ref, wut_ref, o_ref, *, scaling):
    # x_ref  : (TILE_N, H)   row tile of the input
    # wd_ref : (r, H)        down_proj.weight (lane-dense, resident)
    # wut_ref: (r, H)        up_proj.weight^T (lane-dense, resident)
    # o_ref  : (TILE_N, H)
    x = x_ref[...]

    # h = x @ W_down^T  -> (TILE_N, r); contract last dims, no transpose needed.
    h = lax.dot_general(
        x, wd_ref[...],
        dimension_numbers=(((1,), (1,)), ((), ())),
        preferred_element_type=jnp.float32,
    )

    # Scale the low-rank intermediate (N*r elements, not N*H) and cast back to
    # the model dtype so the second matmul keeps narrow MXU operands.
    h = (h * scaling).astype(x.dtype)

    # y = h @ W_up^T  -> (TILE_N, H); wut_ref already holds W_up^T (r, H).
    y = jnp.dot(h, wut_ref[...], preferred_element_type=jnp.float32)
    o_ref[...] = y.astype(o_ref.dtype)


def _choose_tile_n(N, H, r, itemsize, vmem_budget_bytes=32 * 1024 * 1024):
    """Largest row tile that keeps double-buffered x + out + weights in budget."""
    weights_bytes = 2 * (2 * r * H * itemsize)      # both weights, double-buffered
    per_row_bytes = 4 * H * itemsize                # 2 bufs x (x row + out row)
    tile_n = (vmem_budget_bytes - weights_bytes) // max(per_row_bytes, 1)
    tile_n = max(8, min(1024, int(tile_n)))
    tile_n = (tile_n // 8) * 8                      # sublane-aligned
    tile_n = min(tile_n, N)                         # equal-to-full-dim is always legal
    return max(tile_n, 1)


def lora_forward(x, w_down, w_up, alpha, r, *, tile_n=None):
    """x: (N, H); w_down: (r, H); w_up: (H, r). Returns (N, H)."""
    scaling = float(alpha) / float(r)
    N, H = x.shape
    itemsize = jnp.dtype(x.dtype).itemsize

    # Keep w_down lane-dense as-is; only transpose w_up (H, r) -> (r, H),
    # which is lane-dense and tiny (done once, outside the hot path).
    w_up_t = w_up.T  # (r, H)

    if tile_n is None:
        tile_n = _choose_tile_n(N, H, r, itemsize)
    tile_n = min(tile_n, N)

    grid = (pl.cdiv(N, tile_n),)

    kernel = functools.partial(_lora_kernel, scaling=scaling)

    cost = pl.CostEstimate(
        flops=4 * N * r * H,                 # two (N x r x H) matmuls
        transcendentals=0,
        bytes_accessed=2 * N * H * itemsize  # read x + write y
        + 2 * r * H * itemsize,              # both weights
    )

    return pl.pallas_call(
        kernel,
        out_shape=jax.ShapeDtypeStruct((N, H), x.dtype),
        grid_spec=pltpu.PrefetchScalarGridSpec(
            num_scalar_prefetch=0,
            grid=grid,
            in_specs=[
                pl.BlockSpec((tile_n, H), lambda i: (i, 0)),   # x: row tiles
                pl.BlockSpec((r, H), lambda i: (0, 0)),        # W_down: resident
                pl.BlockSpec((r, H), lambda i: (0, 0)),        # W_up^T: resident
            ],
            out_specs=pl.BlockSpec((tile_n, H), lambda i: (i, 0)),
        ),
        compiler_params=pltpu.CompilerParams(
            dimension_semantics=("parallel",),                 # rows independent
            vmem_limit_bytes=48 * 1024 * 1024,                 # headroom on v7x's 64 MiB
        ),
        cost_estimate=cost,
    )(x, w_down, w_up_t)


if __name__ == "__main__":
    # Small shapes consistent with the module: seq=8 tokens, hidden=32, r=8.
    N, H, r, alpha = 8, 32, 8, 32

    key = jax.random.PRNGKey(0)
    kx, kw, ku = jax.random.split(key, 3)

    # Deterministic parameter init matching nn.init:
    #   kaiming_uniform_(a=sqrt(5)) on (r, H) -> U(-1/sqrt(fan_in), 1/sqrt(fan_in))
    bound = 1.0 / math.sqrt(H)
    w_down = jax.random.uniform(kw, (r, H), jnp.float32, minval=-bound, maxval=bound)
    #   zeros_ on up_proj.weight (H, r)
    w_up = jnp.zeros((H, r), jnp.float32)

    x = jax.random.normal(kx, (N, H), jnp.float32)

    # Run with the module's actual init (up_proj == 0 -> output == 0).
    out = lora_forward(x, w_down, w_up, alpha, r)
    out = jax.block_until_ready(out)
    ref = (x @ w_down.T @ w_up.T) * (alpha / r)
    assert out.shape == (N, H)
    assert jnp.allclose(out, ref, atol=1e-5), "mismatch vs reference (zero-init up_proj)"

    # Extra correctness check with a non-zero up_proj so the math is exercised.
    w_up_rand = jax.random.normal(ku, (H, r), jnp.float32) * 0.1
    out2 = jax.block_until_ready(lora_forward(x, w_down, w_up_rand, alpha, r))
    ref2 = (x @ w_down.T @ w_up_rand.T) * (alpha / r)
    assert jnp.allclose(out2, ref2, atol=1e-4), "mismatch vs reference (random up_proj)"

    print("KERNEL_OK")
</pallas_src>

<mosaic_0001>
module attributes {stable_mosaic.version = 11 : i64} {
  func.func @_lora_kernel(%arg0: i32, %arg1: memref<8x32xf32, #tpu.memory_space<vmem>>, %arg2: memref<8x32xf32, #tpu.memory_space<vmem>>, %arg3: memref<8x32xf32, #tpu.memory_space<vmem>>, %arg4: memref<8x32xf32, #tpu.memory_space<vmem>>) attributes {dimension_semantics = [#tpu.dimension_semantics<parallel>], iteration_bounds = array<i64: 1>, scalar_prefetch = 0 : i64, scratch_operands = 0 : i64, tpu.core_type = #tpu.core_type<tc>, window_params = [{transform_indices = @transform_0, window_bounds = array<i64: 8, 32>}, {pipeline_mode = #tpu.pipeline_mode<synchronous>, transform_indices = @transform_1, window_bounds = array<i64: 8, 32>}, {pipeline_mode = #tpu.pipeline_mode<synchronous>, transform_indices = @transform_2, window_bounds = array<i64: 8, 32>}, {transform_indices = @transform_3, window_bounds = array<i64: 8, 32>}]} {
    %c0 = arith.constant 0 : index
    %c0_0 = arith.constant 0 : index
    %0 = vector.load %arg1[%c0, %c0_0] : memref<8x32xf32, #tpu.memory_space<vmem>>, vector<8x32xf32>
    %c0_1 = arith.constant 0 : index
    %c0_2 = arith.constant 0 : index
    %1 = vector.load %arg2[%c0_1, %c0_2] : memref<8x32xf32, #tpu.memory_space<vmem>>, vector<8x32xf32>
    %cst = arith.constant dense<0.000000e+00> : vector<8x8xf32>
    %2 = tpu.matmul %0, %1, %cst {dimension_numbers = #tpu.dot_dimension_numbers<[1], [1], [0], [0], [0, 0, 1, 0], [], []>} : vector<8x32xf32>, vector<8x32xf32>, vector<8x8xf32> -> vector<8x8xf32>
    %cst_3 = arith.constant 4.000000e+00 : f32
    %3 = vector.broadcast %cst_3 : f32 to vector<8x8xf32>
    %4 = arith.mulf %2, %3 : vector<8x8xf32>
    %c0_4 = arith.constant 0 : index
    %c0_5 = arith.constant 0 : index
    %5 = vector.load %arg3[%c0_4, %c0_5] : memref<8x32xf32, #tpu.memory_space<vmem>>, vector<8x32xf32>
    %cst_6 = arith.constant dense<0.000000e+00> : vector<8x32xf32>
    %6 = tpu.matmul %4, %5, %cst_6 {dimension_numbers = #tpu.dot_dimension_numbers<[1], [0], [0], [1], [0, 0, 1, 1], [], []>} : vector<8x8xf32>, vector<8x32xf32>, vector<8x32xf32> -> vector<8x32xf32>
    %c0_7 = arith.constant 0 : index
    %c0_8 = arith.constant 0 : index
    %7 = vector.load %arg4[%c0_7, %c0_8] : memref<8x32xf32, #tpu.memory_space<vmem>>, vector<8x32xf32>
    tpu.vector_store %arg4[%c0_7, %c0_8], %6 {strides = array<i32>} : memref<8x32xf32, #tpu.memory_space<vmem>>, vector<8x32xf32>,
    return
  }
  func.func @transform_0(%arg0: i32) -> (i32, i32) {
    %c0_i32 = arith.constant 0 : i32
    %c0_i32_0 = arith.constant 0 : i32
    return %arg0, %c0_i32 : i32, i32
  }
  func.func @transform_1(%arg0: i32) -> (i32, i32) {
    %c0_i32 = arith.constant 0 : i32
    %c0_i32_0 = arith.constant 0 : i32
    %c0_i32_1 = arith.constant 0 : i32
    return %c0_i32, %c0_i32_0 : i32, i32
  }
  func.func @transform_2(%arg0: i32) -> (i32, i32) {
    %c0_i32 = arith.constant 0 : i32
    %c0_i32_0 = arith.constant 0 : i32
    %c0_i32_1 = arith.constant 0 : i32
    return %c0_i32, %c0_i32_0 : i32, i32
  }
  func.func @transform_3(%arg0: i32) -> (i32, i32) {
    %c0_i32 = arith.constant 0 : i32
    %c0_i32_0 = arith.constant 0 : i32
    return %arg0, %c0_i32 : i32, i32
  }
}

</mosaic_0001>

<llo_original>
// kernel: tpu_custom_call.1
$region0: #{tpu_custom_call.1}
  #allocation0 [shape = 'u32[]', space=smem, size = 0x4, offset = 0x4, fixed_abs, tag = 'smem constant byte address 0x4 - core index']
  #allocation1 [shape = 'u32[72,128]{1,0:T(1,128)}', space=vmem, size = 0x9000, scoped, tag = 'internal scratch']
  %s0 = inlined_call_operand.hbm [shape: f32[8,32], index: 0, kind: input, shape index: {}]
  %s1 = inlined_call_operand.hbm [shape: f32[8,32], index: 1, kind: input, shape index: {}]
  %s2 = inlined_call_operand.hbm [shape: f32[8,32], index: 2, kind: input, shape index: {}]
  %s3 = inlined_call_operand.hbm [shape: f32[8,32], index: 3, kind: output, shape index: {}]
  %s4 = sld [smem:[#allocation0]]
  $region34: #{tpu_custom_call.1} parent=0
    _
  %s6 = ssub.s32 1, %s4
  %s7 = scalar_select 0, %s6, %s4
  $region1: #{tpu_custom_call.1} parent=0
    #allocation2 [shape = 'u8[4096]{0}', space=vmem, size = 0x1000, scoped, tag = 'input window, operand 0, single buffered']
    #allocation3 [shape = 's32[1]{0}', space=sflag, size = 0x4, scoped, tag = 'scoped memory for tpu_custom_call.1']
    #allocation4 [shape = 's32[1]{0}', space=sflag, size = 0x4, scoped, tag = 'scoped memory for tpu_custom_call.1']
    #allocation5 [shape = 'u8[4096]{0}', space=vmem, size = 0x1000, scoped, tag = 'input window, operand 1, single buffered']
    #allocation6 [shape = 's32[1]{0}', space=sflag, size = 0x4, scoped, tag = 'scoped memory for tpu_custom_call.1']
    #allocation7 [shape = 'u8[4096]{0}', space=vmem, size = 0x1000, scoped, tag = 'input window, operand 2, single buffered']
    #allocation8 [shape = 'u8[4096]{0}', space=vmem, size = 0x1000, scoped, tag = 'output window, operand 0, single buffered']
    %8 = vsyncpa [#allocation3], 0
    %9 = vsyncpa [#allocation6], 0
    %10 = vsyncpa [#allocation4], 0
    // Predicated region
    $region2: #{tpu_custom_call.1} parent=1 // pred_check
      _
    $region3: #{tpu_custom_call.1} parent=1 // pred_check_branch
      %12 = sbr.rel (0) target = $region5
    $region4: #{tpu_custom_call.1} parent=1 // pred_region
      %14 = vsyncadd [#allocation3], 0
      %s16 = sshll.u32 %s0, 4
      %s17 = int_to_ptr.hbm [resolvable:$true] %s16
      %s18 = sshll.u32 [#allocation2], 4
      %s19 = int_to_ptr.vmem [resolvable:$true] %s18
      %21 = dma.hbm_to_vmem [thread:$0]  %s17, 128, %s19, [#allocation3]
    $region5: #{tpu_custom_call.1} parent=1 // pred_fallthru
      _
    // Predicated region
    $region6: #{tpu_custom_call.1} parent=1 // pred_check
      _
    $region7: #{tpu_custom_call.1} parent=1 // pred_check_branch
      %23 = sbr.rel (0) target = $region9
    $region8: #{tpu_custom_call.1} parent=1 // pred_region
      %25 = vsyncadd [#allocation6], 0
      %s27 = sshll.u32 %s1, 4
      %s28 = int_to_ptr.hbm [resolvable:$true] %s27
      %s29 = sshll.u32 [#allocation5], 4
      %s30 = int_to_ptr.vmem [resolvable:$true] %s29
      %32 = dma.hbm_to_vmem [thread:$0]  %s28, 128, %s30, [#allocation6]
    $region9: #{tpu_custom_call.1} parent=1 // pred_fallthru
      _
    // Predicated region
    $region10: #{tpu_custom_call.1} parent=1 // pred_check
      _
    $region11: #{tpu_custom_call.1} parent=1 // pred_check_branch
      %34 = sbr.rel (0) target = $region13
    $region12: #{tpu_custom_call.1} parent=1 // pred_region
      %36 = vsyncadd [#allocation6], 0
      %s38 = sshll.u32 %s2, 4
      %s39 = int_to_ptr.hbm [resolvable:$true] %s38
      %s40 = sshll.u32 [#allocation7], 4
      %s41 = int_to_ptr.vmem [resolvable:$true] %s40
      %43 = dma.hbm_to_vmem [thread:$0]  %s39, 128, %s41, [#allocation6]
    $region13: #{tpu_custom_call.1} parent=1 // pred_fallthru
      _
    // Predicated region
    $region14: #{tpu_custom_call.1} parent=1 // pred_check
      _
    $region15: #{tpu_custom_call.1} parent=1 // pred_check_branch
      %45 = sbr.rel (0) target = $region17
    $region16: #{tpu_custom_call.1} parent=1 // pred_region
      %47 = dma.done [#allocation3], 128
    $region17: #{tpu_custom_call.1} parent=1 // pred_fallthru
      _
    // Predicated region
    $region18: #{tpu_custom_call.1} parent=1 // pred_check
      _
    $region19: #{tpu_custom_call.1} parent=1 // pred_check_branch
      %49 = sbr.rel (0) target = $region21
    $region20: #{tpu_custom_call.1} parent=1 // pred_region
      %51 = dma.done [#allocation6], 128
    $region21: #{tpu_custom_call.1} parent=1 // pred_fallthru
      _
    // Predicated region
    $region22: #{tpu_custom_call.1} parent=1 // pred_check
      _
    $region23: #{tpu_custom_call.1} parent=1 // pred_check_branch
      %53 = sbr.rel (0) target = $region25
    $region24: #{tpu_custom_call.1} parent=1 // pred_region
      %55 = dma.done [#allocation6], 128
    $region25: #{tpu_custom_call.1} parent=1 // pred_fallthru
      _
    %v56 = vld [vmem:[#allocation2] sm:$0xff]
    %v57 = vld [vmem:[#allocation5] sm:$0xff]
    %vm58 = vcmask 261120
    %v60 = vsel %vm58, %v56, 0
    %v63 = vsel %vm58, %v57, 0
    %65 = vmatpush.xpose.msra.mxu0 0.0
    %66 = vmatpush.xpose.msra.mxu0 0.0
    %67 = vmatpush.xpose.msra.mxu0 0.0
    %68 = vmatpush.xpose.msra.mxu0 0.0
    %69 = vmatpush.xpose.msra.mxu0 0.0
    %70 = vmatpush.xpose.msra.mxu0 0.0
    %71 = vmatpush.xpose.msra.mxu0 0.0
    %72 = vmatpush.xpose.msra.mxu0 0.0
    %73 = vmatpush.xpose.msra.mxu0 0.0
    %74 = vmatpush.xpose.msra.mxu0 0.0
    %75 = vmatpush.xpose.msra.mxu0 0.0
    %76 = vmatpush.xpose.msra.mxu0 0.0
    %77 = vmatpush.xpose.msra.mxu0 0.0
    %78 = vmatpush.xpose.msra.mxu0 0.0
    %79 = vmatpush.xpose.msra.mxu0 0.0
    %80 = vmatpush.xpose.msra.mxu0 %v63
    %81 = vmatmul.f32.gmra.mxu0 %v60
    %v82 = vpop.f32.mrf.mxu0
    %v83 = vadd.f32 0.0, %v82
    %84 = vdwg.mxu0
    %v85 = vmul.f32 %v83, 4.0
    %v86 = vld [vmem:[#allocation7] sm:$0xff]
    %vm87 = vcmask 64512
    %v89 = vsel %vm87, %v85, 0
    %91 = vmatpush.msra.mxu0 0.0
    %92 = vmatpush.msra.mxu0 0.0
    %93 = vmatpush.msra.mxu0 0.0
    %94 = vmatpush.msra.mxu0 0.0
    %95 = vmatpush.msra.mxu0 0.0
    %96 = vmatpush.msra.mxu0 0.0
    %97 = vmatpush.msra.mxu0 0.0
    %98 = vmatpush.msra.mxu0 0.0
    %99 = vmatpush.msra.mxu0 0.0
    %100 = vmatpush.msra.mxu0 0.0
    %101 = vmatpush.msra.mxu0 0.0
    %102 = vmatpush.msra.mxu0 0.0
    %103 = vmatpush.msra.mxu0 0.0
    %104 = vmatpush.msra.mxu0 0.0
    %105 = vmatpush.msra.mxu0 0.0
    %106 = vmatpush.msra.mxu0 %v86
    %107 = vmatmul.f32.gmra.mxu0 %v89
    %v108 = vpop.f32.mrf.mxu0
    %v109 = vadd.f32 0.0, %v108
    %110 = vdwg.mxu0
    %111 = vst.msk [vmem:[#allocation8] sm:$0xff] %vm58, %v109
    // Predicated region
    $region26: #{tpu_custom_call.1} parent=1 // pred_check
      _
    $region27: #{tpu_custom_call.1} parent=1 // pred_check_branch
      %113 = sbr.rel (0) target = $region29
    $region28: #{tpu_custom_call.1} parent=1 // pred_region
      %115 = vsyncadd [#allocation4], 0
      %s117 = sshll.u32 [#allocation8], 4
      %s118 = int_to_ptr.vmem [resolvable:$true] %s117
      %s119 = sshll.u32 %s3, 4
      %s120 = int_to_ptr.hbm [resolvable:$true] %s119
      %122 = dma.vmem_to_hbm [thread:$0]  %s118, 128, %s120, [#allocation4]
    $region29: #{tpu_custom_call.1} parent=1 // pred_fallthru
      _
    // Predicated region
    $region30: #{tpu_custom_call.1} parent=1 // pred_check
      _
    $region31: #{tpu_custom_call.1} parent=1 // pred_check_branch
      %124 = sbr.rel (0) target = $region33
    $region32: #{tpu_custom_call.1} parent=1 // pred_region
      %126 = dma.done [#allocation4], 128
    $region33: #{tpu_custom_call.1} parent=1 // pred_fallthru
      _
    %127 = vsyncpa [#allocation3], 1
    %128 = vsyncpa [#allocation6], 1
    %129 = vsyncpa [#allocation4], 1

</llo_original>
